<compile_context>
chip_gen: v7x
topology: tpu7x:2x2x1
jax: 0.10.0
libtpu: 0.0.40
codegen_flags: <defaults>
</compile_context>

<pallas_src>
import functools

import jax
import jax.numpy as jnp
import numpy as np
from jax.experimental import pallas as pl
from jax.experimental.pallas import tpu as pltpu

_LANE = 128
_NUM_SLICES = 2                      # leading "parallel" grid axis -> 2 TCs on v7x
_DEFAULT_VMEM_LIMIT = 32 * 1024 * 1024


def _cdiv(a, b):
    return -(-a // b)


def _round_up(a, b):
    return _cdiv(a, b) * b


@functools.lru_cache(maxsize=1)
def _vmem_limit():
    # Spend a good chunk of whatever this generation offers (v5e/v6e: 128 MiB,
    # v7x: 64 MiB); the kernels below only buffer ~2 MiB, so this is headroom.
    try:
        cap = int(pltpu.get_tpu_info().vmem_capacity_bytes)
        return int(min(96 * 1024 * 1024, (cap * 3) // 4))
    except Exception:
        return _DEFAULT_VMEM_LIMIT


# ------------------------------ base (MSE) loss ------------------------------ #

def _mse_kernel(pred_ref, tgt_ref, out_ref):
    @pl.when(pl.program_id(0) == 0)
    def _init():
        out_ref[0, 0] = jnp.float32(0.0)

    d = pred_ref[...].astype(jnp.float32) - tgt_ref[...].astype(jnp.float32)
    out_ref[0, 0] = out_ref[0, 0] + jnp.sum(d * d)


def mse_base_loss(pred, target, *, max_row_tile=512):
    """Tiled MSE-mean stand-in for the unspecified base criterion."""
    pf = jnp.ravel(jnp.asarray(pred))
    tf = jnp.ravel(jnp.asarray(target))
    n = int(pf.size)
    rows_needed = _cdiv(max(n, 1), _LANE)
    row_tile = int(min(max_row_tile, _round_up(rows_needed, 8)))
    chunk = row_tile * _LANE
    npad = _round_up(max(n, 1), chunk)
    if npad != n:
        pf = jnp.concatenate([pf, jnp.zeros((npad - n,), pf.dtype)])
        tf = jnp.concatenate([tf, jnp.zeros((npad - n,), tf.dtype)])
    p2 = pf.reshape(-1, _LANE)
    t2 = tf.reshape(-1, _LANE)

    out = pl.pallas_call(
        _mse_kernel,
        out_shape=jax.ShapeDtypeStruct((1, 1), jnp.float32),
        grid_spec=pltpu.PrefetchScalarGridSpec(
            num_scalar_prefetch=0,
            grid=(npad // chunk,),
            in_specs=[pl.BlockSpec((row_tile, _LANE), lambda i: (i, 0)),
                      pl.BlockSpec((row_tile, _LANE), lambda i: (i, 0))],
            out_specs=pl.BlockSpec((1, 1), lambda i: (0, 0),
                                   memory_space=pltpu.MemorySpace.SMEM)),
        compiler_params=pltpu.CompilerParams(
            dimension_semantics=("arbitrary",),
            vmem_limit_bytes=_vmem_limit()),
    )(p2, t2)
    return out[0, 0] / jnp.float32(n)


# ----------------------------- L1 / L2 raw sums ------------------------------ #

def _pack_norm_params(params, chunk_rows):
    """Concat params (native dtype) into one lane-dense (rows, 128) buffer.

    Each parameter is zero-padded to a whole number of (chunk_rows*128)-element
    chunks so every grid step maps to exactly one parameter; the chunk count is
    padded to a multiple of _NUM_SLICES and the segment table gets a -1 sentinel.
    """
    chunk = chunk_rows * _LANE
    dts = {jnp.asarray(p).dtype for p in params}
    pack_dtype = dts.pop() if len(dts) == 1 else jnp.dtype(jnp.float32)

    pieces, seg_ids = [], []
    for idx, p in enumerate(params):
        flat = jnp.ravel(jnp.asarray(p)).astype(pack_dtype)
        n = int(flat.size)
        n_chunks = max(1, _cdiv(n, chunk))
        pad = n_chunks * chunk - n
        if pad:
            flat = jnp.concatenate([flat, jnp.zeros((pad,), pack_dtype)])
        pieces.append(flat)
        seg_ids += [idx] * n_chunks

    pad_chunks = (-len(seg_ids)) % _NUM_SLICES
    if pad_chunks:                                  # zero chunks: contribute nothing
        pieces.append(jnp.zeros((pad_chunks * chunk,), pack_dtype))
        seg_ids += [seg_ids[-1]] * pad_chunks

    packed = jnp.concatenate(pieces).reshape(-1, _LANE)
    seg_pad = np.asarray(seg_ids + [-1], np.int32)  # sentinel for boundary detection
    chunks_per_slice = len(seg_ids) // _NUM_SLICES
    return packed, seg_pad, chunks_per_slice


def _make_norm_kernel(n_params, chunks_per_slice):
    def kernel(seg_ref, chunk_ref, sums_ref, acc_abs, acc_sq):
        r = pl.program_id(0)                        # TensorCore slice   (parallel)
        c = pl.program_id(1)                        # chunk within slice (arbitrary)

        @pl.when(c == 0)
        def _init():
            for p_idx in range(n_params):           # static P, scalar SMEM stores
                sums_ref[p_idx, 0] = jnp.float32(0.0)
                sums_ref[p_idx, 1] = jnp.float32(0.0)
            acc_abs[...] = jnp.zeros_like(acc_abs)
            acc_sq[...] = jnp.zeros_like(acc_sq)

        x = chunk_ref[...].astype(jnp.float32)      # (chunk_rows, 128), zero padded
        acc_abs[...] = acc_abs[...] + jnp.sum(jnp.abs(x), axis=0, keepdims=True)
        acc_sq[...] = acc_sq[...] + jnp.sum(x * x, axis=0, keepdims=True)

        gc = r * chunks_per_slice + c               # global chunk index
        seg = seg_ref[gc]
        nxt = seg_ref[gc + 1]                       # sentinel-terminated table

        @pl.when(jnp.logical_or(c == chunks_per_slice - 1, seg != nxt))
        def _flush():                               # parameter boundary only
            sums_ref[seg, 0] = sums_ref[seg, 0] + jnp.sum(acc_abs[...])
            sums_ref[seg, 1] = sums_ref[seg, 1] + jnp.sum(acc_sq[...])
            acc_abs[...] = jnp.zeros_like(acc_abs)
            acc_sq[...] = jnp.zeros_like(acc_sq)

    return kernel


def norm_param_sums(params, *, chunk_rows=1024):
    """Per-parameter (sum|x|, sum x^2) in one pallas_call, 2-way core split."""
    packed, seg_pad, cps = _pack_norm_params(params, chunk_rows)
    n_params = len(params)

    out = pl.pallas_call(
        _make_norm_kernel(n_params, cps),
        out_shape=jax.ShapeDtypeStruct((_NUM_SLICES * n_params, 2), jnp.float32),
        grid_spec=pltpu.PrefetchScalarGridSpec(
            num_scalar_prefetch=1,
            grid=(_NUM_SLICES, cps),
            in_specs=[pl.BlockSpec((chunk_rows, _LANE),
                                   lambda r, c, seg: (r * cps + c, 0))],
            out_specs=pl.BlockSpec((n_params, 2), lambda r, c, seg: (r, 0),
                                   memory_space=pltpu.MemorySpace.SMEM),
            scratch_shapes=[pltpu.VMEM((1, _LANE), jnp.float32),
                            pltpu.VMEM((1, _LANE), jnp.float32)]),
        compiler_params=pltpu.CompilerParams(
            dimension_semantics=("parallel", "arbitrary"),
            vmem_limit_bytes=_vmem_limit()),
    )(jnp.asarray(seg_pad), packed)
    # per-core partial sums -> combine
    return out.reshape(_NUM_SLICES, n_params, 2).sum(axis=0)


# ----------------------------- correlation loss ------------------------------ #

def _pack_conv_weights(weights, tile_m_max):
    """Pack qualifying conv weights as (Kmax+1, total_tiles*tile_m); last row = ones."""
    kmax = max(int(w.shape[2]) * int(w.shape[3]) for w in weights)
    max_m = max(int(w.shape[0]) * int(w.shape[1]) for w in weights)
    tile_m = int(max(_LANE, min(tile_m_max, _round_up(max_m, _LANE))))
    dts = {jnp.asarray(w).dtype for w in weights}
    pack_dtype = dts.pop() if len(dts) == 1 else jnp.dtype(jnp.float32)

    slabs, layer_ids, m_per_layer = [], [], []
    for idx, w in enumerate(weights):
        o, i, kh, kw = (int(s) for s in w.shape)
        k, m = kh * kw, o * i
        # identical values to torch w.view(-1, O, I) with each slice flattened
        w2 = jnp.reshape(jnp.asarray(w), (k, m)).astype(pack_dtype)
        n_tiles = _cdiv(m, tile_m)
        pad_cols = n_tiles * tile_m - m
        if pad_cols:
            w2 = jnp.concatenate([w2, jnp.zeros((k, pad_cols), pack_dtype)], axis=1)
        if k < kmax:                                 # kernel-size groups merged
            w2 = jnp.concatenate(
                [w2, jnp.zeros((kmax - k, w2.shape[1]), pack_dtype)], axis=0)
        w2 = jnp.concatenate([w2, jnp.ones((1, w2.shape[1]), pack_dtype)], axis=0)
        slabs.append(w2)
        layer_ids += [idx] * n_tiles
        m_per_layer.append(m)

    packed = jnp.concatenate(slabs, axis=1)
    lid_pad = np.asarray(layer_ids + [-1], np.int32)  # sentinel terminates last layer
    return packed, lid_pad, np.asarray(m_per_layer, np.int32), kmax, tile_m


def _make_corr_kernel(kmax):
    k = kmax

    def kernel(lid_ref, m_ref, w_ref, out_ref, gram_ref):
        t = pl.program_id(0)

        @pl.when(t == 0)
        def _init():
            out_ref[0, 0] = jnp.float32(0.0)
            gram_ref[...] = jnp.zeros_like(gram_ref)

        # (K+1, tile_m) tile with a trailing ones row: one MXU pass yields raw second
        # moments (top-left KxK) and row sums (last row/col) simultaneously.
        x = w_ref[...].astype(jnp.float32)
        gram_ref[...] = gram_ref[...] + jax.lax.dot_general(
            x, x, (((1,), (1,)), ((), ())), preferred_element_type=jnp.float32)

        layer = lid_ref[t]
        nxt = lid_ref[t + 1]                          # sentinel-terminated table

        @pl.when(layer != nxt)
        def _flush():                                 # layer boundary: emit r^2 sum
            gram = gram_ref[...]                      # (K+1, K+1)
            inv_m = 1.0 / m_ref[layer].astype(jnp.float32)   # true (unpadded) columns
            raw = gram[:k, :k]
            s_col = gram[:k, k:k + 1]                 # (K, 1) row sums
            s_row = gram[k:k + 1, :k]                 # (1, K) row sums
            cov = raw - (s_col * s_row) * inv_m       # centered dot products
            ii = jax.lax.broadcasted_iota(jnp.int32, (k, k), 0)
            jj = jax.lax.broadcasted_iota(jnp.int32, (k, k), 1)
            d = jnp.where(ii == jj, cov, 0.0)
            var_col = jnp.sum(d, axis=1, keepdims=True)   # (K, 1) variances
            var_row = jnp.sum(d, axis=0, keepdims=True)   # (1, K) variances
            denom = var_col * var_row
            safe = jnp.where(denom > 0.0, denom, 1.0)     # zero-var / padded-row guard
            r2 = jnp.where(denom > 0.0, (cov * cov) / safe, 0.0)
            out_ref[0, 0] = out_ref[0, 0] + jnp.sum(jnp.where(jj > ii, r2, 0.0))
            gram_ref[...] = jnp.zeros_like(gram_ref)

    return kernel


def conv_corr_loss(weights, *, tile_m_max=4096):
    """sum over conv layers of sum_{i<j} pearsonr(kernel rows)^2 in ONE pallas_call."""
    packed, lid_pad, m_per_layer, kmax, tile_m = _pack_conv_weights(weights, tile_m_max)
    n_tiles = int(lid_pad.shape[0]) - 1

    out = pl.pallas_call(
        _make_corr_kernel(kmax),
        out_shape=jax.ShapeDtypeStruct((1, 1), jnp.float32),
        grid_spec=pltpu.PrefetchScalarGridSpec(
            num_scalar_prefetch=2,
            grid=(n_tiles,),
            in_specs=[pl.BlockSpec((kmax + 1, tile_m), lambda t, lid, mpl: (0, t))],
            out_specs=pl.BlockSpec((1, 1), lambda t, lid, mpl: (0, 0),
                                   memory_space=pltpu.MemorySpace.SMEM),
            scratch_shapes=[pltpu.VMEM((kmax + 1, kmax + 1), jnp.float32)]),
        compiler_params=pltpu.CompilerParams(
            dimension_semantics=("arbitrary",),
            vmem_limit_bytes=_vmem_limit()),
    )(jnp.asarray(lid_pad), jnp.asarray(m_per_layer), packed)
    return out[0, 0]


# ---------------------------- module forward port ---------------------------- #

def extra_train_loss_mixin_forward(pred, target, epoch, norm_params, conv_weights,
                                   l1reg=None, l2reg=None, corrreg=None, training=True,
                                   chunk_rows_big=1024, chunk_rows_small=64,
                                   corr_tile_m=4096):
    """Forward pass of ExtraTrainLossMixin. Returns (base_loss, extra_loss).

    ExtraTrainLoss.apply(base, extra) forward-returns base_loss.clone(); extra_loss
    is computed on the forward path (for the custom backward) and returned as well.
    """
    del epoch  # unused by the loss value itself
    base_loss = mse_base_loss(pred, target)

    if not training or (l1reg is None and l2reg is None and corrreg is None):
        return base_loss, None

    l1_loss = l2_loss = corr_loss = jnp.zeros((), jnp.float32)

    if (l1reg is not None or l2reg is not None) and norm_params:
        big_threshold = chunk_rows_big * _LANE
        size_classes = (
            ([p for p in norm_params if int(np.prod(p.shape)) >= big_threshold],
             chunk_rows_big),
            ([p for p in norm_params if int(np.prod(p.shape)) < big_threshold],
             chunk_rows_small),
        )
        for group, rows in size_classes:
            if not group:
                continue
            sums = norm_param_sums(group, chunk_rows=rows)
            if l1reg is not None:
                l1_loss = l1_loss + jnp.sum(sums[:, 0])            # sum_p ||p||_1
            if l2reg is not None:
                l2_loss = l2_loss + jnp.sum(jnp.sqrt(sums[:, 1]))  # sum_p ||p||_2

    if corrreg is not None:
        qualifying = [w for w in conv_weights
                      if int(w.shape[2]) > 1 or int(w.shape[3]) > 1]
        if qualifying:
            corr_loss = conv_corr_loss(qualifying, tile_m_max=corr_tile_m)

    extra_loss = l1_loss + l2_loss + corr_loss
    # ExtraTrainLoss.apply(base, extra) forward-returns base_loss.clone().
    return base_loss, extra_loss


# ----------------------------------- main ------------------------------------ #

if __name__ == "__main__":
    key = jax.random.PRNGKey(0)
    ks = jax.random.split(key, 12)

    B, C = 2, 4
    pred = jax.random.normal(ks[0], (B, C), jnp.float32)
    target = jax.random.normal(ks[1], (B, C), jnp.float32)

    norm_params = [
        jax.random.normal(ks[2], (8,), jnp.float32),
        jax.random.normal(ks[3], (16,), jnp.float32),
        jax.random.normal(ks[4], (3000,), jnp.float32) * 0.05,
        jax.random.normal(ks[5], (9000,), jnp.float32) * 0.05,      # several small chunks
        jax.random.normal(ks[6], (192, 1024), jnp.float32) * 0.01,  # big class, 2 chunks
    ]
    conv_weights = [
        jax.random.normal(ks[7], (8, 4, 3, 3), jnp.float32) * 0.1,   # 3x3 -> corr loss
        jax.random.normal(ks[8], (16, 8, 3, 3), jnp.float32) * 0.1,  # 3x3 -> corr loss
        jax.random.normal(ks[9], (4, 2, 5, 5), jnp.float32) * 0.1,   # 5x5 -> merged-K path
        jax.random.normal(ks[10], (8, 8, 1, 1), jnp.float32) * 0.1,  # 1x1 -> skipped
    ]

    base, extra = extra_train_loss_mixin_forward(
        pred, target, epoch=0,
        norm_params=norm_params, conv_weights=conv_weights,
        l1reg=1e-4, l2reg=1e-4, corrreg=1e-3, training=True)
    qualifying = [w for w in conv_weights if w.shape[2] > 1 or w.shape[3] > 1]
    corr = conv_corr_loss(qualifying)
    jax.block_until_ready((base, extra, corr))

    # --- pure numpy reference check (float64) ---
    p_np, t_np = np.asarray(pred, np.float64), np.asarray(target, np.float64)
    base_ref = np.mean((p_np - t_np) ** 2)
    l1_ref = sum(np.sum(np.abs(np.asarray(p, np.float64))) for p in norm_params)
    l2_ref = sum(np.sqrt(np.sum(np.asarray(p, np.float64) ** 2)) for p in norm_params)

    corr_ref = 0.0
    for w in conv_weights:
        o, i, kh, kw = w.shape
        if kh * kw <= 1:
            continue
        w2 = np.asarray(w, np.float64).reshape(kh * kw, o * i)
        for a in range(w2.shape[0]):
            for b in range(a + 1, w2.shape[0]):
                xa = w2[a] - w2[a].mean()
                xb = w2[b] - w2[b].mean()
                r = xa.dot(xb) / (np.linalg.norm(xa) * np.linalg.norm(xb))
                corr_ref += r ** 2
    extra_ref = l1_ref + l2_ref + corr_ref

    np.testing.assert_allclose(np.asarray(base), base_ref, rtol=1e-4, atol=1e-5)
    np.testing.assert_allclose(np.asarray(corr), corr_ref, rtol=2e-3, atol=1e-3)
    np.testing.assert_allclose(np.asarray(extra), extra_ref, rtol=2e-3, atol=1e-2)

    print("KERNEL_OK")
</pallas_src>

<mosaic_0001>
module attributes {stable_mosaic.version = 11 : i64} {
  func.func @_mse_kernel(%arg0: i32, %arg1: memref<8x128xf32, #tpu.memory_space<vmem>>, %arg2: memref<8x128xf32, #tpu.memory_space<vmem>>, %arg3: memref<1x1xf32, #tpu.memory_space<smem>>) attributes {dimension_semantics = [#tpu.dimension_semantics<arbitrary>], iteration_bounds = array<i64: 1>, scalar_prefetch = 0 : i64, scratch_operands = 0 : i64, tpu.core_type = #tpu.core_type<tc>, window_params = [{transform_indices = @transform_0, window_bounds = array<i64: 8, 128>}, {transform_indices = @transform_1, window_bounds = array<i64: 8, 128>}, {transform_indices = @transform_2, window_bounds = array<i64: 1, 1>}]} {
    %c0_i32 = arith.constant 0 : i32
    %0 = arith.cmpi eq, %arg0, %c0_i32 : i32
    %1 = arith.extui %0 : i1 to i32
    %c0_i32_0 = arith.constant 0 : i32
    %2 = arith.cmpi ne, %1, %c0_i32_0 : i32
    scf.if %2 {
      %cst_8 = arith.constant 0.000000e+00 : f32
      %c0_9 = arith.constant 0 : index
      %c0_10 = arith.constant 0 : index
      %14 = memref.load %arg3[%c0_9, %c0_10] : memref<1x1xf32, #tpu.memory_space<smem>>
      memref.store %cst_8, %arg3[%c0_9, %c0_10] : memref<1x1xf32, #tpu.memory_space<smem>>
    } else {
    }
    %c0 = arith.constant 0 : index
    %c0_1 = arith.constant 0 : index
    %3 = vector.load %arg1[%c0, %c0_1] : memref<8x128xf32, #tpu.memory_space<vmem>>, vector<8x128xf32>
    %c0_2 = arith.constant 0 : index
    %c0_3 = arith.constant 0 : index
    %4 = vector.load %arg2[%c0_2, %c0_3] : memref<8x128xf32, #tpu.memory_space<vmem>>, vector<8x128xf32>
    %5 = arith.subf %3, %4 : vector<8x128xf32>
    %c0_4 = arith.constant 0 : index
    %c0_5 = arith.constant 0 : index
    %6 = memref.load %arg3[%c0_4, %c0_5] : memref<1x1xf32, #tpu.memory_space<smem>>
    %7 = arith.mulf %5, %5 : vector<8x128xf32>
    %8 = vector.shape_cast %7 : vector<8x128xf32> to vector<1x8x128xf32>
    %cst = arith.constant dense<0.000000e+00> : vector<1xf32>
    %9 = vector.multi_reduction <add>, %8, %cst [1, 2] : vector<1x8x128xf32> to vector<1xf32>
    %10 = vector.shape_cast %9 : vector<1xf32> to vector<1x1x1xf32>
    %11 = vector.extract %10[0, 0, 0] : f32 from vector<1x1x1xf32>
    %12 = arith.addf %6, %11 : f32
    %c0_6 = arith.constant 0 : index
    %c0_7 = arith.constant 0 : index
    %13 = memref.load %arg3[%c0_6, %c0_7] : memref<1x1xf32, #tpu.memory_space<smem>>
    memref.store %12, %arg3[%c0_6, %c0_7] : memref<1x1xf32, #tpu.memory_space<smem>>
    return
  }
  func.func @transform_0(%arg0: i32) -> (i32, i32) {
    %c0_i32 = arith.constant 0 : i32
    %c0_i32_0 = arith.constant 0 : i32
    return %arg0, %c0_i32 : i32, i32
  }
  func.func @transform_1(%arg0: i32) -> (i32, i32) {
    %c0_i32 = arith.constant 0 : i32
    %c0_i32_0 = arith.constant 0 : i32
    return %arg0, %c0_i32 : i32, i32
  }
  func.func @transform_2(%arg0: i32) -> (i32, i32) {
    %c0_i32 = arith.constant 0 : i32
    %c0_i32_0 = arith.constant 0 : i32
    %c0_i32_1 = arith.constant 0 : i32
    return %c0_i32, %c0_i32_0 : i32, i32
  }
}

</mosaic_0001>

<llo_original>
// kernel: tpu_custom_call.1
$region0: #{tpu_custom_call.1}
  #allocation0 [shape = 'u32[]', space=smem, size = 0x4, offset = 0x4, fixed_abs, tag = 'smem constant byte address 0x4 - core index']
  #allocation1 [shape = 'u32[144,128]{1,0:T(1,128)}', space=vmem, size = 0x12000, scoped, tag = 'internal scratch']
  %s0 = inlined_call_operand.hbm [shape: f32[8,128], index: 0, kind: input, shape index: {}]
  %s1 = inlined_call_operand.hbm [shape: f32[8,128], index: 1, kind: input, shape index: {}]
  %s2 = inlined_call_operand.hbm [shape: f32[1,1], index: 2, kind: output, shape index: {}]
  %s3 = sld [smem:[#allocation0]]
  $region30: #{tpu_custom_call.1} parent=0
    _
  %s5 = ssub.s32 1, %s3
  %s6 = scalar_select 0, %s5, %s3
  $region1: #{tpu_custom_call.1} parent=0
    #allocation2 [shape = 'u8[4096]{0}', space=vmem, size = 0x1000, scoped, tag = 'input window, operand 0, single buffered']
    #allocation3 [shape = 's32[1]{0}', space=sflag, size = 0x4, scoped, tag = 'scoped memory for tpu_custom_call.1']
    #allocation4 [shape = 's32[1]{0}', space=sflag, size = 0x4, scoped, tag = 'scoped memory for tpu_custom_call.1']
    #allocation5 [shape = 'u8[4096]{0}', space=vmem, size = 0x1000, scoped, tag = 'input window, operand 1, single buffered']
    #allocation6 [shape = 's32[1]{0}', space=sflag, size = 0x4, scoped, tag = 'scoped memory for tpu_custom_call.1']
    #allocation7 [shape = 'u8[512]{0}', space=smem, size = 0x200, scoped, tag = 'output window, operand 0, single buffered']
    %7 = vsyncpa [#allocation3], 0
    %8 = vsyncpa [#allocation6], 0
    %9 = vsyncpa [#allocation4], 0
    // Predicated region
    $region2: #{tpu_custom_call.1} parent=1 // pred_check
      _
    $region3: #{tpu_custom_call.1} parent=1 // pred_check_branch
      %11 = sbr.rel (0) target = $region5
    $region4: #{tpu_custom_call.1} parent=1 // pred_region
      %s13 = ssub.s32 128, 128
      %14 = vsyncadd [#allocation3], %s13
      %s16 = sshll.u32 [#allocation2], 4
      %s17 = int_to_ptr.vmem [resolvable:$true] %s16
      %19 = dma.hbm_to_vmem [thread:$0]  %s0, 128, %s17, [#allocation3]
    $region5: #{tpu_custom_call.1} parent=1 // pred_fallthru
      _
    // Predicated region
    $region6: #{tpu_custom_call.1} parent=1 // pred_check
      _
    $region7: #{tpu_custom_call.1} parent=1 // pred_check_branch
      %21 = sbr.rel (0) target = $region9
    $region8: #{tpu_custom_call.1} parent=1 // pred_region
      %s23 = ssub.s32 128, 128
      %24 = vsyncadd [#allocation6], %s23
      %s26 = sshll.u32 [#allocation5], 4
      %s27 = int_to_ptr.vmem [resolvable:$true] %s26
      %29 = dma.hbm_to_vmem [thread:$0]  %s1, 128, %s27, [#allocation6]
    $region9: #{tpu_custom_call.1} parent=1 // pred_fallthru
      _
    // Predicated region
    $region10: #{tpu_custom_call.1} parent=1 // pred_check
      _
    $region11: #{tpu_custom_call.1} parent=1 // pred_check_branch
      %31 = sbr.rel (0) target = $region13
    $region12: #{tpu_custom_call.1} parent=1 // pred_region
      %32 = dma.done [#allocation3], 128
    $region13: #{tpu_custom_call.1} parent=1 // pred_fallthru
      _
    // Predicated region
    $region14: #{tpu_custom_call.1} parent=1 // pred_check
      _
    $region15: #{tpu_custom_call.1} parent=1 // pred_check_branch
      %34 = sbr.rel (0) target = $region17
    $region16: #{tpu_custom_call.1} parent=1 // pred_region
      %35 = dma.done [#allocation6], 128
    $region17: #{tpu_custom_call.1} parent=1 // pred_fallthru
      _
    %p36 = scmp.eq.s32.totalorder 0, 0
    // Predicated region
    $region18: #{tpu_custom_call.1} parent=1 // pred_check
      %p37 = pneg %p36
    $region19: #{tpu_custom_call.1} parent=1 // pred_check_branch
      %39 = sbr.rel (%p37) target = $region21
    $region20: #{tpu_custom_call.1} parent=1 // pred_region
      %s40 = scalar_lea.smem [#allocation7], 0
      %41 = sst [smem:[%s40]] 0.0
    $region21: #{tpu_custom_call.1} parent=1 // pred_fallthru
      _
    %v42 = vld [vmem:[#allocation2] sm:$0xff]
    %v43 = vld [vmem:[#allocation5] sm:$0xff]
    %v44 = vsub.f32 %v42, %v43
    %s45 = sld [smem:[#allocation7]]
    %v46 = vmul.f32 %v44, %v44
    %47 = vadd.xlane.f32.xlu0 %v46
    %v48 = vpop.xlane.xlu0 %47
    %v49 = vrot.slane %v48, 4
    %v50 = vadd.f32 %v48, %v49
    %v51 = vrot.slane %v50, 2
    %v52 = vadd.f32 %v50, %v51
    %v53 = vrot.slane %v52, 1
    %v54 = vadd.f32 %v52, %v53
    %s55 = vtos %v54
    %s56 = sadd.f32 %s45, %s55
    %s57 = scalar_lea.smem [#allocation7], 0
    %58 = sst [smem:[%s57]] %s56
    // Predicated region
    $region22: #{tpu_custom_call.1} parent=1 // pred_check
      _
    $region23: #{tpu_custom_call.1} parent=1 // pred_check_branch
      %60 = sbr.rel (0) target = $region25
    $region24: #{tpu_custom_call.1} parent=1 // pred_region
      %s62 = ssub.s32 16, 16
      %63 = vsyncadd [#allocation4], %s62
      %66 = dma.smem_to_hbm [#allocation7], 16, %s2, [#allocation4]
    $region25: #{tpu_custom_call.1} parent=1 // pred_fallthru
      _
    // Predicated region
    $region26: #{tpu_custom_call.1} parent=1 // pred_check
      _
    $region27: #{tpu_custom_call.1} parent=1 // pred_check_branch
      %68 = sbr.rel (0) target = $region29
    $region28: #{tpu_custom_call.1} parent=1 // pred_region
      %69 = dma.done [#allocation4], 16
    $region29: #{tpu_custom_call.1} parent=1 // pred_fallthru
      _
    %70 = sfence
    %71 = vsyncpa [#allocation3], 1
    %72 = vsyncpa [#allocation6], 1
    %73 = vsyncpa [#allocation4], 1

</llo_original>
